<compile_context>
chip_gen: v5e
topology: v5e:2x2
jax: 0.10.0
libtpu: 0.0.40
codegen_flags: <defaults>
</compile_context>

<pallas_src>
import functools

import numpy as np
import jax
import jax.numpy as jnp
from jax.experimental import pallas as pl
from jax.experimental.pallas import tpu as pltpu

EPS = 1e-5  # BatchNorm2d default eps


def _convt_bn_sigmoid_kernel(x_ref, w_ref, gb_ref, mask_ref, o_ref,
                             xpad_ref, stk_ref, *, H, W, Wp, KH, KW, pad):
    """Fused conv (== ConvTranspose2d s=1,p=1) + train-mode BN + sigmoid.

    x_ref:    (N, Cin, H*W)       input images, each channel flattened row-major.
    w_ref:    (Cout, KH*KW*Cin)   equivalent-conv weight; column order (kh, kw, ci).
    gb_ref:   (Cout, 2)           [gamma, beta]  (conv bias cancels under train BN).
    mask_ref: (1, H*Wp)           1.0 on real output columns, 0.0 on junk columns.
    o_ref:    (Cout, N*H*W)       lane-dense output (256 lanes for the module shape).
    xpad_ref: (Cin, L)            scratch: zero-padded image flattened with row
                                  stride Wp, L >= (KH-1)*Wp + (KW-1) + H*Wp.
    stk_ref:  (KH*KW*Cin, H*Wp)   scratch: stacked im2col operand for ONE matmul.
    """
    n_batch = x_ref.shape[0]
    cin = x_ref.shape[1]
    cout = w_ref.shape[0]
    wide = H * Wp
    hw = H * W

    # --- conv: one MXU matmul per image; wide-slab result kept in registers -------
    slabs = []
    for n in range(n_batch):
        if n == 0:
            # zero once; the border stays zero, the interior is overwritten per batch
            xpad_ref[...] = jnp.zeros_like(xpad_ref)
        for hh in range(H):                       # in-kernel zero-pad (no XLA pad op)
            dst = (pad + hh) * Wp + pad
            xpad_ref[:, dst:dst + W] = x_ref[n, :, hh * W:(hh + 1) * W]
        # Every kernel tap (kh, kw) is ONE contiguous slice of the flat padded image
        # ("wide slab" trick); stack all taps so the conv is a single K=KH*KW*Cin dot.
        for kh in range(KH):
            for kw in range(KW):
                t = kh * KW + kw
                src = kh * Wp + kw
                stk_ref[t * cin:(t + 1) * cin, :] = xpad_ref[:, src:src + wide]
        slabs.append(jnp.dot(w_ref[...], stk_ref[...],
                             preferred_element_type=jnp.float32))

    # --- BatchNorm batch statistics on the wide slabs (junk columns masked out) ---
    mask = mask_ref[...]                          # (1, wide)
    s1 = jnp.zeros((cout, 1), jnp.float32)
    s2 = jnp.zeros((cout, 1), jnp.float32)
    for slab in slabs:
        v = slab * mask
        s1 = s1 + jnp.sum(v, axis=1, keepdims=True)
        s2 = s2 + jnp.sum(slab * v, axis=1, keepdims=True)
    inv_m = 1.0 / float(n_batch * hw)
    mean = s1 * inv_m
    var = s2 * inv_m - mean * mean                # biased variance (training mode)
    gb = gb_ref[...]
    scale = gb[:, 0:1] * jax.lax.rsqrt(var + EPS)
    shift = gb[:, 1:2] - mean * scale

    # --- normalize + sigmoid on the wide slab; compact layout stored exactly once -
    for n, slab in enumerate(slabs):
        z = 0.5 * jnp.tanh(0.5 * (slab * scale + shift)) + 0.5   # exact sigmoid
        for hh in range(H):
            o_ref[:, n * hw + hh * W:n * hw + (hh + 1) * W] = \
                z[:, hh * Wp:hh * Wp + W]


def prepare_params(wt, gamma, beta):
    """One-time parameter prep (hoisted out of the per-call path; cacheable).

    wt: ConvTranspose2d weight, shape (Cin, Cout, KH, KW).
    The conv bias is intentionally unused: under training-mode BatchNorm it cancels.
    """
    Cin, Cout, KH, KW = wt.shape
    # ConvTranspose2d(stride=1, padding=1) == Conv2d with flipped, channel-swapped
    # weight and "same" spatial padding.
    w_conv = jnp.flip(wt.astype(jnp.float32), axis=(2, 3))        # (Cin, Cout, KH, KW)
    # column order must match stk row order: ((kh*KW + kw)*Cin + ci)
    w_flat = jnp.transpose(w_conv, (1, 2, 3, 0)).reshape(Cout, KH * KW * Cin)
    gb = jnp.stack([gamma, beta], axis=1).astype(jnp.float32)     # (Cout, 2)
    return w_flat, gb


@functools.partial(jax.jit, static_argnames=("kh", "kw"))
def convt_bn_sigmoid(x_nchw, w_flat, gb, *, kh=3, kw=3):
    """x_nchw: (N, Cin, H, W); w_flat/gb from prepare_params()."""
    N, Cin, H, W = x_nchw.shape
    Cout = w_flat.shape[0]
    pad = kh - 1 - 1                       # equivalent-conv padding for p_transpose=1
    Wp = W + 2 * pad
    wide = H * Wp
    hw = H * W
    L = (kh - 1) * Wp + (kw - 1) + wide    # flat length the last tap slice needs

    x_flat = x_nchw.astype(jnp.float32).reshape(N, Cin, hw)   # metadata-only reshape

    # Compile-time constant validity mask (real output columns of the wide slab).
    mask_np = np.zeros((1, wide), np.float32)
    mask_np.reshape(H, Wp)[:, :W] = 1.0
    mask = jnp.asarray(mask_np)

    kernel = functools.partial(_convt_bn_sigmoid_kernel,
                               H=H, W=W, Wp=Wp, KH=kh, KW=kw, pad=pad)

    out = pl.pallas_call(
        kernel,
        out_shape=jax.ShapeDtypeStruct((Cout, N * hw), jnp.float32),
        in_specs=[pl.BlockSpec(memory_space=pltpu.MemorySpace.VMEM)] * 4,
        out_specs=pl.BlockSpec(memory_space=pltpu.MemorySpace.VMEM),
        scratch_shapes=[
            pltpu.VMEM((Cin, L), jnp.float32),              # padded flat image
            pltpu.VMEM((kh * kw * Cin, wide), jnp.float32),  # stacked im2col operand
        ],
        cost_estimate=pl.CostEstimate(
            flops=2 * N * Cout * Cin * kh * kw * wide + 10 * Cout * N * wide,
            transcendentals=Cout * N * wide,
            bytes_accessed=4 * (x_flat.size + w_flat.size + gb.size
                                + mask.size + Cout * N * hw),
        ),
    )(x_flat, w_flat, gb, mask)

    # Lane-dense (Cout, N*H*W) -> NCHW; for N == 1 this is a pure metadata reshape.
    if N == 1:
        return out.reshape(Cout, H, W)[None]
    return out.reshape(Cout, N, H, W).transpose(1, 0, 2, 3)


def _reference(x, wt, bias, gamma, beta):
    """Pure-JAX reference of the PyTorch module's forward (training-mode BN)."""
    w_conv = jnp.transpose(jnp.flip(wt, axis=(2, 3)), (1, 0, 2, 3))   # (Cout,Cin,KH,KW)
    y = jax.lax.conv_general_dilated(
        x, w_conv, window_strides=(1, 1), padding=((1, 1), (1, 1)),
        dimension_numbers=("NCHW", "OIHW", "NCHW"))
    y = y + bias[None, :, None, None]
    mean = jnp.mean(y, axis=(0, 2, 3), keepdims=True)
    var = jnp.mean((y - mean) ** 2, axis=(0, 2, 3), keepdims=True)
    y = (y - mean) * jax.lax.rsqrt(var + EPS)
    y = y * gamma[None, :, None, None] + beta[None, :, None, None]
    return jax.nn.sigmoid(y)


if __name__ == "__main__":
    key = jax.random.PRNGKey(0)
    k_x, k_w, k_b, k_g, k_be = jax.random.split(key, 5)

    # Shapes from the module spec: x1 = torch.randn(1, 2, 16, 16), ConvT(2->16, k=3).
    N, Cin, H, W = 1, 2, 16, 16
    Cout, KH, KW = 16, 3, 3

    x1 = jax.random.normal(k_x, (N, Cin, H, W), dtype=jnp.float32)
    wt = 0.1 * jax.random.normal(k_w, (Cin, Cout, KH, KW), dtype=jnp.float32)
    bias = 0.1 * jax.random.normal(k_b, (Cout,), dtype=jnp.float32)
    # Non-default affine params to exercise the gamma/beta path (semantics unchanged).
    gamma = 1.0 + 0.1 * jax.random.normal(k_g, (Cout,), dtype=jnp.float32)
    beta = 0.1 * jax.random.normal(k_be, (Cout,), dtype=jnp.float32)
    # TODO(synk): BatchNorm2d running_mean/running_var buffer updates are not emulated
    # (only the forward activation is produced, as in the module's forward()).

    w_flat, gb = prepare_params(wt, gamma, beta)     # one-time prep (cacheable)
    out = convt_bn_sigmoid(x1, w_flat, gb, kh=KH, kw=KW)
    jax.block_until_ready(out)

    assert out.shape == (N, Cout, H, W)
    assert bool(jnp.all(jnp.isfinite(out)))

    ref = _reference(x1, wt, bias, gamma, beta)      # reference keeps the conv bias
    err = float(jnp.max(jnp.abs(out - ref)))
    assert err < 1e-4, f"max abs error {err}"

    print("KERNEL_OK")
</pallas_src>

<mosaic_0001>
module attributes {stable_mosaic.version = 11 : i64} {
  func.func @_convt_bn_sigmoid_kernel(%arg0: memref<1x2x256xf32, #tpu.memory_space<vmem>>, %arg1: memref<16x18xf32, #tpu.memory_space<vmem>>, %arg2: memref<16x2xf32, #tpu.memory_space<vmem>>, %arg3: memref<1x288xf32, #tpu.memory_space<vmem>>, %arg4: memref<16x256xf32, #tpu.memory_space<vmem>>, %arg5: memref<2x326xf32, #tpu.memory_space<vmem>>, %arg6: memref<18x288xf32, #tpu.memory_space<vmem>>) attributes {dimension_semantics = [], scalar_prefetch = 0 : i64, scratch_operands = 2 : i64, tpu.core_type = #tpu.core_type<tc>} {
    %cst = arith.constant 0.000000e+00 : f32
    %0 = vector.broadcast %cst : f32 to vector<2x326xf32>
    %c0 = arith.constant 0 : index
    %c0_0 = arith.constant 0 : index
    %1 = vector.load %arg5[%c0, %c0_0] : memref<2x326xf32, #tpu.memory_space<vmem>>, vector<2x326xf32>
    tpu.vector_store %arg5[%c0, %c0_0], %0 {strides = array<i32>} : memref<2x326xf32, #tpu.memory_space<vmem>>, vector<2x326xf32>,
    %c0_1 = arith.constant 0 : index
    %c0_2 = arith.constant 0 : index
    %c0_3 = arith.constant 0 : index
    %2 = vector.load %arg0[%c0_1, %c0_2, %c0_3] : memref<1x2x256xf32, #tpu.memory_space<vmem>>, vector<1x2x16xf32>
    %3 = vector.shape_cast %2 : vector<1x2x16xf32> to vector<2x16xf32>
    %c0_4 = arith.constant 0 : index
    %c19 = arith.constant 19 : index
    %4 = vector.load %arg5[%c0_4, %c19] : memref<2x326xf32, #tpu.memory_space<vmem>>, vector<2x16xf32>
    tpu.vector_store %arg5[%c0_4, %c19], %3 {strides = array<i32>} : memref<2x326xf32, #tpu.memory_space<vmem>>, vector<2x16xf32>,
    %c0_5 = arith.constant 0 : index
    %c0_6 = arith.constant 0 : index
    %c16 = arith.constant 16 : index
    %5 = vector.load %arg0[%c0_5, %c0_6, %c16] : memref<1x2x256xf32, #tpu.memory_space<vmem>>, vector<1x2x16xf32>
    %6 = vector.shape_cast %5 : vector<1x2x16xf32> to vector<2x16xf32>
    %c0_7 = arith.constant 0 : index
    %c37 = arith.constant 37 : index
    %7 = vector.load %arg5[%c0_7, %c37] : memref<2x326xf32, #tpu.memory_space<vmem>>, vector<2x16xf32>
    tpu.vector_store %arg5[%c0_7, %c37], %6 {strides = array<i32>} : memref<2x326xf32, #tpu.memory_space<vmem>>, vector<2x16xf32>,
    %c0_8 = arith.constant 0 : index
    %c0_9 = arith.constant 0 : index
    %c32 = arith.constant 32 : index
    %8 = vector.load %arg0[%c0_8, %c0_9, %c32] : memref<1x2x256xf32, #tpu.memory_space<vmem>>, vector<1x2x16xf32>
    %9 = vector.shape_cast %8 : vector<1x2x16xf32> to vector<2x16xf32>
    %c0_10 = arith.constant 0 : index
    %c55 = arith.constant 55 : index
    %10 = vector.load %arg5[%c0_10, %c55] : memref<2x326xf32, #tpu.memory_space<vmem>>, vector<2x16xf32>
    tpu.vector_store %arg5[%c0_10, %c55], %9 {strides = array<i32>} : memref<2x326xf32, #tpu.memory_space<vmem>>, vector<2x16xf32>,
    %c0_11 = arith.constant 0 : index
    %c0_12 = arith.constant 0 : index
    %c48 = arith.constant 48 : index
    %11 = vector.load %arg0[%c0_11, %c0_12, %c48] : memref<1x2x256xf32, #tpu.memory_space<vmem>>, vector<1x2x16xf32>
    %12 = vector.shape_cast %11 : vector<1x2x16xf32> to vector<2x16xf32>
    %c0_13 = arith.constant 0 : index
    %c73 = arith.constant 73 : index
    %13 = vector.load %arg5[%c0_13, %c73] : memref<2x326xf32, #tpu.memory_space<vmem>>, vector<2x16xf32>
    tpu.vector_store %arg5[%c0_13, %c73], %12 {strides = array<i32>} : memref<2x326xf32, #tpu.memory_space<vmem>>, vector<2x16xf32>,
    %c0_14 = arith.constant 0 : index
    %c0_15 = arith.constant 0 : index
    %c64 = arith.constant 64 : index
    %14 = vector.load %arg0[%c0_14, %c0_15, %c64] : memref<1x2x256xf32, #tpu.memory_space<vmem>>, vector<1x2x16xf32>
    %15 = vector.shape_cast %14 : vector<1x2x16xf32> to vector<2x16xf32>
    %c0_16 = arith.constant 0 : index
    %c91 = arith.constant 91 : index
    %16 = vector.load %arg5[%c0_16, %c91] : memref<2x326xf32, #tpu.memory_space<vmem>>, vector<2x16xf32>
    tpu.vector_store %arg5[%c0_16, %c91], %15 {strides = array<i32>} : memref<2x326xf32, #tpu.memory_space<vmem>>, vector<2x16xf32>,
    %c0_17 = arith.constant 0 : index
    %c0_18 = arith.constant 0 : index
    %c80 = arith.constant 80 : index
    %17 = vector.load %arg0[%c0_17, %c0_18, %c80] : memref<1x2x256xf32, #tpu.memory_space<vmem>>, vector<1x2x16xf32>
    %18 = vector.shape_cast %17 : vector<1x2x16xf32> to vector<2x16xf32>
    %c0_19 = arith.constant 0 : index
    %c109 = arith.constant 109 : index
    %19 = vector.load %arg5[%c0_19, %c109] : memref<2x326xf32, #tpu.memory_space<vmem>>, vector<2x16xf32>
    tpu.vector_store %arg5[%c0_19, %c109], %18 {strides = array<i32>} : memref<2x326xf32, #tpu.memory_space<vmem>>, vector<2x16xf32>,
    %c0_20 = arith.constant 0 : index
    %c0_21 = arith.constant 0 : index
    %c96 = arith.constant 96 : index
    %20 = vector.load %arg0[%c0_20, %c0_21, %c96] : memref<1x2x256xf32, #tpu.memory_space<vmem>>, vector<1x2x16xf32>
    %21 = vector.shape_cast %20 : vector<1x2x16xf32> to vector<2x16xf32>
    %c0_22 = arith.constant 0 : index
    %c127 = arith.constant 127 : index
    %22 = vector.load %arg5[%c0_22, %c127] : memref<2x326xf32, #tpu.memory_space<vmem>>, vector<2x16xf32>
    tpu.vector_store %arg5[%c0_22, %c127], %21 {strides = array<i32>} : memref<2x326xf32, #tpu.memory_space<vmem>>, vector<2x16xf32>,
    %c0_23 = arith.constant 0 : index
    %c0_24 = arith.constant 0 : index
    %c112 = arith.constant 112 : index
    %23 = vector.load %arg0[%c0_23, %c0_24, %c112] : memref<1x2x256xf32, #tpu.memory_space<vmem>>, vector<1x2x16xf32>
    %24 = vector.shape_cast %23 : vector<1x2x16xf32> to vector<2x16xf32>
    %c0_25 = arith.constant 0 : index
    %c145 = arith.constant 145 : index
    %25 = vector.load %arg5[%c0_25, %c145] : memref<2x326xf32, #tpu.memory_space<vmem>>, vector<2x16xf32>
    tpu.vector_store %arg5[%c0_25, %c145], %24 {strides = array<i32>} : memref<2x326xf32, #tpu.memory_space<vmem>>, vector<2x16xf32>,
    %c0_26 = arith.constant 0 : index
    %c0_27 = arith.constant 0 : index
    %c128 = arith.constant 128 : index
    %26 = vector.load %arg0[%c0_26, %c0_27, %c128] : memref<1x2x256xf32, #tpu.memory_space<vmem>>, vector<1x2x16xf32>
    %27 = vector.shape_cast %26 : vector<1x2x16xf32> to vector<2x16xf32>
    %c0_28 = arith.constant 0 : index
    %c163 = arith.constant 163 : index
    %28 = vector.load %arg5[%c0_28, %c163] : memref<2x326xf32, #tpu.memory_space<vmem>>, vector<2x16xf32>
    tpu.vector_store %arg5[%c0_28, %c163], %27 {strides = array<i32>} : memref<2x326xf32, #tpu.memory_space<vmem>>, vector<2x16xf32>,
    %c0_29 = arith.constant 0 : index
    %c0_30 = arith.constant 0 : index
    %c144 = arith.constant 144 : index
    %29 = vector.load %arg0[%c0_29, %c0_30, %c144] : memref<1x2x256xf32, #tpu.memory_space<vmem>>, vector<1x2x16xf32>
    %30 = vector.shape_cast %29 : vector<1x2x16xf32> to vector<2x16xf32>
    %c0_31 = arith.constant 0 : index
    %c181 = arith.constant 181 : index
    %31 = vector.load %arg5[%c0_31, %c181] : memref<2x326xf32, #tpu.memory_space<vmem>>, vector<2x16xf32>
    tpu.vector_store %arg5[%c0_31, %c181], %30 {strides = array<i32>} : memref<2x326xf32, #tpu.memory_space<vmem>>, vector<2x16xf32>,
    %c0_32 = arith.constant 0 : index
    %c0_33 = arith.constant 0 : index
    %c160 = arith.constant 160 : index
    %32 = vector.load %arg0[%c0_32, %c0_33, %c160] : memref<1x2x256xf32, #tpu.memory_space<vmem>>, vector<1x2x16xf32>
    %33 = vector.shape_cast %32 : vector<1x2x16xf32> to vector<2x16xf32>
    %c0_34 = arith.constant 0 : index
    %c199 = arith.constant 199 : index
    %34 = vector.load %arg5[%c0_34, %c199] : memref<2x326xf32, #tpu.memory_space<vmem>>, vector<2x16xf32>
    tpu.vector_store %arg5[%c0_34, %c199], %33 {strides = array<i32>} : memref<2x326xf32, #tpu.memory_space<vmem>>, vector<2x16xf32>,
    %c0_35 = arith.constant 0 : index
    %c0_36 = arith.constant 0 : index
    %c176 = arith.constant 176 : index
    %35 = vector.load %arg0[%c0_35, %c0_36, %c176] : memref<1x2x256xf32, #tpu.memory_space<vmem>>, vector<1x2x16xf32>
    %36 = vector.shape_cast %35 : vector<1x2x16xf32> to vector<2x16xf32>
    %c0_37 = arith.constant 0 : index
    %c217 = arith.constant 217 : index
    %37 = vector.load %arg5[%c0_37, %c217] : memref<2x326xf32, #tpu.memory_space<vmem>>, vector<2x16xf32>
    tpu.vector_store %arg5[%c0_37, %c217], %36 {strides = array<i32>} : memref<2x326xf32, #tpu.memory_space<vmem>>, vector<2x16xf32>,
    %c0_38 = arith.constant 0 : index
    %c0_39 = arith.constant 0 : index
    %c192 = arith.constant 192 : index
    %38 = vector.load %arg0[%c0_38, %c0_39, %c192] : memref<1x2x256xf32, #tpu.memory_space<vmem>>, vector<1x2x16xf32>
    %39 = vector.shape_cast %38 : vector<1x2x16xf32> to vector<2x16xf32>
    %c0_40 = arith.constant 0 : index
    %c235 = arith.constant 235 : index
    %40 = vector.load %arg5[%c0_40, %c235] : memref<2x326xf32, #tpu.memory_space<vmem>>, vector<2x16xf32>
    tpu.vector_store %arg5[%c0_40, %c235], %39 {strides = array<i32>} : memref<2x326xf32, #tpu.memory_space<vmem>>, vector<2x16xf32>,
    %c0_41 = arith.constant 0 : index
    %c0_42 = arith.constant 0 : index
    %c208 = arith.constant 208 : index
    %41 = vector.load %arg0[%c0_41, %c0_42, %c208] : memref<1x2x256xf32, #tpu.memory_space<vmem>>, vector<1x2x16xf32>
    %42 = vector.shape_cast %41 : vector<1x2x16xf32> to vector<2x16xf32>
    %c0_43 = arith.constant 0 : index
    %c253 = arith.constant 253 : index
    %43 = vector.load %arg5[%c0_43, %c253] : memref<2x326xf32, #tpu.memory_space<vmem>>, vector<2x16xf32>
    tpu.vector_store %arg5[%c0_43, %c253], %42 {strides = array<i32>} : memref<2x326xf32, #tpu.memory_space<vmem>>, vector<2x16xf32>,
    %c0_44 = arith.constant 0 : index
    %c0_45 = arith.constant 0 : index
    %c224 = arith.constant 224 : index
    %44 = vector.load %arg0[%c0_44, %c0_45, %c224] : memref<1x2x256xf32, #tpu.memory_space<vmem>>, vector<1x2x16xf32>
    %45 = vector.shape_cast %44 : vector<1x2x16xf32> to vector<2x16xf32>
    %c0_46 = arith.constant 0 : index
    %c271 = arith.constant 271 : index
    %46 = vector.load %arg5[%c0_46, %c271] : memref<2x326xf32, #tpu.memory_space<vmem>>, vector<2x16xf32>
    tpu.vector_store %arg5[%c0_46, %c271], %45 {strides = array<i32>} : memref<2x326xf32, #tpu.memory_space<vmem>>, vector<2x16xf32>,
    %c0_47 = arith.constant 0 : index
    %c0_48 = arith.constant 0 : index
    %c240 = arith.constant 240 : index
    %47 = vector.load %arg0[%c0_47, %c0_48, %c240] : memref<1x2x256xf32, #tpu.memory_space<vmem>>, vector<1x2x16xf32>
    %48 = vector.shape_cast %47 : vector<1x2x16xf32> to vector<2x16xf32>
    %c0_49 = arith.constant 0 : index
    %c289 = arith.constant 289 : index
    %49 = vector.load %arg5[%c0_49, %c289] : memref<2x326xf32, #tpu.memory_space<vmem>>, vector<2x16xf32>
    tpu.vector_store %arg5[%c0_49, %c289], %48 {strides = array<i32>} : memref<2x326xf32, #tpu.memory_space<vmem>>, vector<2x16xf32>,
    %c0_50 = arith.constant 0 : index
    %c0_51 = arith.constant 0 : index
    %50 = vector.load %arg5[%c0_50, %c0_51] : memref<2x326xf32, #tpu.memory_space<vmem>>, vector<2x288xf32>
    %c0_52 = arith.constant 0 : index
    %c0_53 = arith.constant 0 : index
    %51 = vector.load %arg6[%c0_52, %c0_53] : memref<18x288xf32, #tpu.memory_space<vmem>>, vector<2x288xf32>
    tpu.vector_store %arg6[%c0_52, %c0_53], %50 {strides = array<i32>} : memref<18x288xf32, #tpu.memory_space<vmem>>, vector<2x288xf32>,
    %c0_54 = arith.constant 0 : index
    %c1 = arith.constant 1 : index
    %52 = vector.load %arg5[%c0_54, %c1] : memref<2x326xf32, #tpu.memory_space<vmem>>, vector<2x288xf32>
    %c2 = arith.constant 2 : index
    %c0_55 = arith.constant 0 : index
    %53 = vector.load %arg6[%c2, %c0_55] : memref<18x288xf32, #tpu.memory_space<vmem>>, vector<2x288xf32>
    tpu.vector_store %arg6[%c2, %c0_55], %52 {strides = array<i32>} : memref<18x288xf32, #tpu.memory_space<vmem>>, vector<2x288xf32>,
    %c0_56 = arith.constant 0 : index
    %c2_57 = arith.constant 2 : index
    %54 = vector.load %arg5[%c0_56, %c2_57] : memref<2x326xf32, #tpu.memory_space<vmem>>, vector<2x288xf32>
    %c4 = arith.constant 4 : index
    %c0_58 = arith.constant 0 : index
    %55 = vector.load %arg6[%c4, %c0_58] : memref<18x288xf32, #tpu.memory_space<vmem>>, vector<2x288xf32>
    tpu.vector_store %arg6[%c4, %c0_58], %54 {strides = array<i32>} : memref<18x288xf32, #tpu.memory_space<vmem>>, vector<2x288xf32>,
    %c0_59 = arith.constant 0 : index
    %c18 = arith.constant 18 : index
    %56 = vector.load %arg5[%c0_59, %c18] : memref<2x326xf32, #tpu.memory_space<vmem>>, vector<2x288xf32>
    %c6 = arith.constant 6 : index
    %c0_60 = arith.constant 0 : index
    %57 = vector.load %arg6[%c6, %c0_60] : memref<18x288xf32, #tpu.memory_space<vmem>>, vector<2x288xf32>
    tpu.vector_store %arg6[%c6, %c0_60], %56 {strides = array<i32>} : memref<18x288xf32, #tpu.memory_space<vmem>>, vector<2x288xf32>,
    %c0_61 = arith.constant 0 : index
    %c19_62 = arith.constant 19 : index
    %58 = vector.load %arg5[%c0_61, %c19_62] : memref<2x326xf32, #tpu.memory_space<vmem>>, vector<2x288xf32>
    %c8 = arith.constant 8 : index
    %c0_63 = arith.constant 0 : index
    %59 = vector.load %arg6[%c8, %c0_63] : memref<18x288xf32, #tpu.memory_space<vmem>>, vector<2x288xf32>
    tpu.vector_store %arg6[%c8, %c0_63], %58 {strides = array<i32>} : memref<18x288xf32, #tpu.memory_space<vmem>>, vector<2x288xf32>,
    %c0_64 = arith.constant 0 : index
    %c20 = arith.constant 20 : index
    %60 = vector.load %arg5[%c0_64, %c20] : memref<2x326xf32, #tpu.memory_space<vmem>>, vector<2x288xf32>
    %c10 = arith.constant 10 : index
    %c0_65 = arith.constant 0 : index
    %61 = vector.load %arg6[%c10, %c0_65] : memref<18x288xf32, #tpu.memory_space<vmem>>, vector<2x288xf32>
    tpu.vector_store %arg6[%c10, %c0_65], %60 {strides = array<i32>} : memref<18x288xf32, #tpu.memory_space<vmem>>, vector<2x288xf32>,
    %c0_66 = arith.constant 0 : index
    %c36 = arith.constant 36 : index
    %62 = vector.load %arg5[%c0_66, %c36] : memref<2x326xf32, #tpu.memory_space<vmem>>, vector<2x288xf32>
    %c12 = arith.constant 12 : index
    %c0_67 = arith.constant 0 : index
    %63 = vector.load %arg6[%c12, %c0_67] : memref<18x288xf32, #tpu.memory_space<vmem>>, vector<2x288xf32>
    tpu.vector_store %arg6[%c12, %c0_67], %62 {strides = array<i32>} : memref<18x288xf32, #tpu.memory_space<vmem>>, vector<2x288xf32>,
    %c0_68 = arith.constant 0 : index
    %c37_69 = arith.constant 37 : index
    %64 = vector.load %arg5[%c0_68, %c37_69] : memref<2x326xf32, #tpu.memory_space<vmem>>, vector<2x288xf32>
    %c14 = arith.constant 14 : index
    %c0_70 = arith.constant 0 : index
    %65 = vector.load %arg6[%c14, %c0_70] : memref<18x288xf32, #tpu.memory_space<vmem>>, vector<2x288xf32>
    tpu.vector_store %arg6[%c14, %c0_70], %64 {strides = array<i32>} : memref<18x288xf32, #tpu.memory_space<vmem>>, vector<2x288xf32>,
    %c0_71 = arith.constant 0 : index
    %c38 = arith.constant 38 : index
    %66 = vector.load %arg5[%c0_71, %c38] : memref<2x326xf32, #tpu.memory_space<vmem>>, vector<2x288xf32>
    %c16_72 = arith.constant 16 : index
    %c0_73 = arith.constant 0 : index
    %67 = vector.load %arg6[%c16_72, %c0_73] : memref<18x288xf32, #tpu.memory_space<vmem>>, vector<2x288xf32>
    tpu.vector_store %arg6[%c16_72, %c0_73], %66 {strides = array<i32>} : memref<18x288xf32, #tpu.memory_space<vmem>>, vector<2x288xf32>,
    %c0_74 = arith.constant 0 : index
    %c0_75 = arith.constant 0 : index
    %68 = vector.load %arg1[%c0_74, %c0_75] : memref<16x18xf32, #tpu.memory_space<vmem>>, vector<16x18xf32>
    %c0_76 = arith.constant 0 : index
    %c0_77 = arith.constant 0 : index
    %69 = vector.load %arg6[%c0_76, %c0_77] : memref<18x288xf32, #tpu.memory_space<vmem>>, vector<18x288xf32>
    %cst_78 = arith.constant dense<0.000000e+00> : vector<16x288xf32>
    %70 = tpu.matmul %68, %69, %cst_78 {dimension_numbers = #tpu.dot_dimension_numbers<[1], [0], [0], [1], [0, 0, 1, 1], [], []>} : vector<16x18xf32>, vector<18x288xf32>, vector<16x288xf32> -> vector<16x288xf32>
    %c0_79 = arith.constant 0 : index
    %c0_80 = arith.constant 0 : index
    %71 = vector.load %arg3[%c0_79, %c0_80] : memref<1x288xf32, #tpu.memory_space<vmem>>, vector<1x288xf32>
    %cst_81 = arith.constant 0.000000e+00 : f32
    %72 = vector.broadcast %cst_81 : f32 to vector<16x1xf32>
    %cst_82 = arith.constant 0.000000e+00 : f32
    %73 = vector.broadcast %cst_82 : f32 to vector<16x1xf32>
    %74 = vector.broadcast %71 : vector<1x288xf32> to vector<16x288xf32>
    %75 = arith.mulf %70, %74 : vector<16x288xf32>
    %cst_83 = arith.constant dense<0.000000e+00> : vector<16xf32>
    %76 = vector.multi_reduction <add>, %75, %cst_83 [1] : vector<16x288xf32> to vector<16xf32>
    %77 = vector.shape_cast %76 : vector<16xf32> to vector<16x1xf32>
    %78 = arith.addf %72, %77 : vector<16x1xf32>
    %79 = arith.mulf %70, %75 : vector<16x288xf32>
    %cst_84 = arith.constant dense<0.000000e+00> : vector<16xf32>
    %80 = vector.multi_reduction <add>, %79, %cst_84 [1] : vector<16x288xf32> to vector<16xf32>
    %81 = vector.shape_cast %80 : vector<16xf32> to vector<16x1xf32>
    %82 = arith.addf %73, %81 : vector<16x1xf32>
    %cst_85 = arith.constant 3.906250e-03 : f32
    %83 = vector.broadcast %cst_85 : f32 to vector<16x1xf32>
    %84 = arith.mulf %78, %83 : vector<16x1xf32>
    %cst_86 = arith.constant 3.906250e-03 : f32
    %85 = vector.broadcast %cst_86 : f32 to vector<16x1xf32>
    %86 = arith.mulf %82, %85 : vector<16x1xf32>
    %87 = arith.mulf %84, %84 : vector<16x1xf32>
    %88 = arith.subf %86, %87 : vector<16x1xf32>
    %c0_87 = arith.constant 0 : index
    %c0_88 = arith.constant 0 : index
    %89 = vector.load %arg2[%c0_87, %c0_88] : memref<16x2xf32, #tpu.memory_space<vmem>>, vector<16x2xf32>
    %90 = vector.extract_strided_slice %89 {offsets = [0, 0], sizes = [16, 1], strides = [1, 1]} : vector<16x2xf32> to vector<16x1xf32>
    %cst_89 = arith.constant 9.99999974E-6 : f32
    %91 = vector.broadcast %cst_89 : f32 to vector<16x1xf32>
    %92 = arith.addf %88, %91 : vector<16x1xf32>
    %93 = math.rsqrt %92 : vector<16x1xf32>
    %94 = arith.mulf %90, %93 : vector<16x1xf32>
    %95 = vector.extract_strided_slice %89 {offsets = [0, 1], sizes = [16, 1], strides = [1, 1]} : vector<16x2xf32> to vector<16x1xf32>
    %96 = arith.mulf %84, %94 : vector<16x1xf32>
    %97 = arith.subf %95, %96 : vector<16x1xf32>
    %98 = vector.broadcast %94 : vector<16x1xf32> to vector<16x288xf32>
    %99 = arith.mulf %70, %98 : vector<16x288xf32>
    %100 = vector.broadcast %97 : vector<16x1xf32> to vector<16x288xf32>
    %101 = arith.addf %99, %100 : vector<16x288xf32>
    %cst_90 = arith.constant 5.000000e-01 : f32
    %102 = vector.broadcast %cst_90 : f32 to vector<16x288xf32>
    %103 = arith.mulf %102, %101 : vector<16x288xf32>
    %104 = math.tanh %103 : vector<16x288xf32>
    %cst_91 = arith.constant 5.000000e-01 : f32
    %105 = vector.broadcast %cst_91 : f32 to vector<16x288xf32>
    %106 = arith.mulf %105, %104 : vector<16x288xf32>
    %cst_92 = arith.constant 5.000000e-01 : f32
    %107 = vector.broadcast %cst_92 : f32 to vector<16x288xf32>
    %108 = arith.addf %106, %107 : vector<16x288xf32>
    %109 = vector.extract_strided_slice %108 {offsets = [0, 0], sizes = [16, 16], strides = [1, 1]} : vector<16x288xf32> to vector<16x16xf32>
    %c0_93 = arith.constant 0 : index
    %c0_94 = arith.constant 0 : index
    %110 = vector.load %arg4[%c0_93, %c0_94] : memref<16x256xf32, #tpu.memory_space<vmem>>, vector<16x16xf32>
    tpu.vector_store %arg4[%c0_93, %c0_94], %109 {strides = array<i32>} : memref<16x256xf32, #tpu.memory_space<vmem>>, vector<16x16xf32>,
    %111 = vector.extract_strided_slice %108 {offsets = [0, 18], sizes = [16, 16], strides = [1, 1]} : vector<16x288xf32> to vector<16x16xf32>
    %c0_95 = arith.constant 0 : index
    %c16_96 = arith.constant 16 : index
    %112 = vector.load %arg4[%c0_95, %c16_96] : memref<16x256xf32, #tpu.memory_space<vmem>>, vector<16x16xf32>
    tpu.vector_store %arg4[%c0_95, %c16_96], %111 {strides = array<i32>} : memref<16x256xf32, #tpu.memory_space<vmem>>, vector<16x16xf32>,
    %113 = vector.extract_strided_slice %108 {offsets = [0, 36], sizes = [16, 16], strides = [1, 1]} : vector<16x288xf32> to vector<16x16xf32>
    %c0_97 = arith.constant 0 : index
    %c32_98 = arith.constant 32 : index
    %114 = vector.load %arg4[%c0_97, %c32_98] : memref<16x256xf32, #tpu.memory_space<vmem>>, vector<16x16xf32>
    tpu.vector_store %arg4[%c0_97, %c32_98], %113 {strides = array<i32>} : memref<16x256xf32, #tpu.memory_space<vmem>>, vector<16x16xf32>,
    %115 = vector.extract_strided_slice %108 {offsets = [0, 54], sizes = [16, 16], strides = [1, 1]} : vector<16x288xf32> to vector<16x16xf32>
    %c0_99 = arith.constant 0 : index
    %c48_100 = arith.constant 48 : index
    %116 = vector.load %arg4[%c0_99, %c48_100] : memref<16x256xf32, #tpu.memory_space<vmem>>, vector<16x16xf32>
    tpu.vector_store %arg4[%c0_99, %c48_100], %115 {strides = array<i32>} : memref<16x256xf32, #tpu.memory_space<vmem>>, vector<16x16xf32>,
    %117 = vector.extract_strided_slice %108 {offsets = [0, 72], sizes = [16, 16], strides = [1, 1]} : vector<16x288xf32> to vector<16x16xf32>
    %c0_101 = arith.constant 0 : index
    %c64_102 = arith.constant 64 : index
    %118 = vector.load %arg4[%c0_101, %c64_102] : memref<16x256xf32, #tpu.memory_space<vmem>>, vector<16x16xf32>
    tpu.vector_store %arg4[%c0_101, %c64_102], %117 {strides = array<i32>} : memref<16x256xf32, #tpu.memory_space<vmem>>, vector<16x16xf32>,
    %119 = vector.extract_strided_slice %108 {offsets = [0, 90], sizes = [16, 16], strides = [1, 1]} : vector<16x288xf32> to vector<16x16xf32>
    %c0_103 = arith.constant 0 : index
    %c80_104 = arith.constant 80 : index
    %120 = vector.load %arg4[%c0_103, %c80_104] : memref<16x256xf32, #tpu.memory_space<vmem>>, vector<16x16xf32>
    tpu.vector_store %arg4[%c0_103, %c80_104], %119 {strides = array<i32>} : memref<16x256xf32, #tpu.memory_space<vmem>>, vector<16x16xf32>,
    %121 = vector.extract_strided_slice %108 {offsets = [0, 108], sizes = [16, 16], strides = [1, 1]} : vector<16x288xf32> to vector<16x16xf32>
    %c0_105 = arith.constant 0 : index
    %c96_106 = arith.constant 96 : index
    %122 = vector.load %arg4[%c0_105, %c96_106] : memref<16x256xf32, #tpu.memory_space<vmem>>, vector<16x16xf32>
    tpu.vector_store %arg4[%c0_105, %c96_106], %121 {strides = array<i32>} : memref<16x256xf32, #tpu.memory_space<vmem>>, vector<16x16xf32>,
    %123 = vector.extract_strided_slice %108 {offsets = [0, 126], sizes = [16, 16], strides = [1, 1]} : vector<16x288xf32> to vector<16x16xf32>
    %c0_107 = arith.constant 0 : index
    %c112_108 = arith.constant 112 : index
    %124 = vector.load %arg4[%c0_107, %c112_108] : memref<16x256xf32, #tpu.memory_space<vmem>>, vector<16x16xf32>
    tpu.vector_store %arg4[%c0_107, %c112_108], %123 {strides = array<i32>} : memref<16x256xf32, #tpu.memory_space<vmem>>, vector<16x16xf32>,
    %125 = vector.extract_strided_slice %108 {offsets = [0, 144], sizes = [16, 16], strides = [1, 1]} : vector<16x288xf32> to vector<16x16xf32>
    %c0_109 = arith.constant 0 : index
    %c128_110 = arith.constant 128 : index
    %126 = vector.load %arg4[%c0_109, %c128_110] : memref<16x256xf32, #tpu.memory_space<vmem>>, vector<16x16xf32>
    tpu.vector_store %arg4[%c0_109, %c128_110], %125 {strides = array<i32>} : memref<16x256xf32, #tpu.memory_space<vmem>>, vector<16x16xf32>,
    %127 = vector.extract_strided_slice %108 {offsets = [0, 162], sizes = [16, 16], strides = [1, 1]} : vector<16x288xf32> to vector<16x16xf32>
    %c0_111 = arith.constant 0 : index
    %c144_112 = arith.constant 144 : index
    %128 = vector.load %arg4[%c0_111, %c144_112] : memref<16x256xf32, #tpu.memory_space<vmem>>, vector<16x16xf32>
    tpu.vector_store %arg4[%c0_111, %c144_112], %127 {strides = array<i32>} : memref<16x256xf32, #tpu.memory_space<vmem>>, vector<16x16xf32>,
    %129 = vector.extract_strided_slice %108 {offsets = [0, 180], sizes = [16, 16], strides = [1, 1]} : vector<16x288xf32> to vector<16x16xf32>
    %c0_113 = arith.constant 0 : index
    %c160_114 = arith.constant 160 : index
    %130 = vector.load %arg4[%c0_113, %c160_114] : memref<16x256xf32, #tpu.memory_space<vmem>>, vector<16x16xf32>
    tpu.vector_store %arg4[%c0_113, %c160_114], %129 {strides = array<i32>} : memref<16x256xf32, #tpu.memory_space<vmem>>, vector<16x16xf32>,
    %131 = vector.extract_strided_slice %108 {offsets = [0, 198], sizes = [16, 16], strides = [1, 1]} : vector<16x288xf32> to vector<16x16xf32>
    %c0_115 = arith.constant 0 : index
    %c176_116 = arith.constant 176 : index
    %132 = vector.load %arg4[%c0_115, %c176_116] : memref<16x256xf32, #tpu.memory_space<vmem>>, vector<16x16xf32>
    tpu.vector_store %arg4[%c0_115, %c176_116], %131 {strides = array<i32>} : memref<16x256xf32, #tpu.memory_space<vmem>>, vector<16x16xf32>,
    %133 = vector.extract_strided_slice %108 {offsets = [0, 216], sizes = [16, 16], strides = [1, 1]} : vector<16x288xf32> to vector<16x16xf32>
    %c0_117 = arith.constant 0 : index
    %c192_118 = arith.constant 192 : index
    %134 = vector.load %arg4[%c0_117, %c192_118] : memref<16x256xf32, #tpu.memory_space<vmem>>, vector<16x16xf32>
    tpu.vector_store %arg4[%c0_117, %c192_118], %133 {strides = array<i32>} : memref<16x256xf32, #tpu.memory_space<vmem>>, vector<16x16xf32>,
    %135 = vector.extract_strided_slice %108 {offsets = [0, 234], sizes = [16, 16], strides = [1, 1]} : vector<16x288xf32> to vector<16x16xf32>
    %c0_119 = arith.constant 0 : index
    %c208_120 = arith.constant 208 : index
    %136 = vector.load %arg4[%c0_119, %c208_120] : memref<16x256xf32, #tpu.memory_space<vmem>>, vector<16x16xf32>
    tpu.vector_store %arg4[%c0_119, %c208_120], %135 {strides = array<i32>} : memref<16x256xf32, #tpu.memory_space<vmem>>, vector<16x16xf32>,
    %137 = vector.extract_strided_slice %108 {offsets = [0, 252], sizes = [16, 16], strides = [1, 1]} : vector<16x288xf32> to vector<16x16xf32>
    %c0_121 = arith.constant 0 : index
    %c224_122 = arith.constant 224 : index
    %138 = vector.load %arg4[%c0_121, %c224_122] : memref<16x256xf32, #tpu.memory_space<vmem>>, vector<16x16xf32>
    tpu.vector_store %arg4[%c0_121, %c224_122], %137 {strides = array<i32>} : memref<16x256xf32, #tpu.memory_space<vmem>>, vector<16x16xf32>,
    %139 = vector.extract_strided_slice %108 {offsets = [0, 270], sizes = [16, 16], strides = [1, 1]} : vector<16x288xf32> to vector<16x16xf32>
    %c0_123 = arith.constant 0 : index
    %c240_124 = arith.constant 240 : index
    %140 = vector.load %arg4[%c0_123, %c240_124] : memref<16x256xf32, #tpu.memory_space<vmem>>, vector<16x16xf32>
    tpu.vector_store %arg4[%c0_123, %c240_124], %139 {strides = array<i32>} : memref<16x256xf32, #tpu.memory_space<vmem>>, vector<16x16xf32>,
    return
  }
}

</mosaic_0001>

<llo_original>
// kernel: convt_bn_sigmoid.1
$region0: #{convt_bn_sigmoid.1}
  #allocation0 [shape = 'u32[]', space=smem, size = 0x4, offset = 0x4, fixed_abs, tag = 'smem constant byte address 0x4 - core index']
  #allocation1 [shape = 'u32[72,128]{1,0:T(1,128)}', space=vmem, size = 0x9000, scoped, tag = 'internal scratch']
  #allocation2 [shape = 'f32[2,326]{1,0:T(2,128)}', space=vmem, size = 0xc00, scoped, tag = 'scratch operand']
  #allocation3 [shape = 'f32[18,288]{1,0:T(8,128)}', space=vmem, size = 0x9000, scoped, tag = 'scratch operand']
  %s0 = inlined_call_operand.vmem [shape: f32[1,2,256], index: 0, kind: input, shape index: {}]
  %s1 = inlined_call_operand.vmem [shape: f32[16,18], index: 1, kind: input, shape index: {}]
  %s2 = inlined_call_operand.vmem [shape: f32[16,2], index: 2, kind: input, shape index: {}]
  %s3 = inlined_call_operand.vmem [shape: f32[1,288], index: 3, kind: input, shape index: {}]
  %s4 = inlined_call_operand.vmem [shape: f32[16,256], index: 4, kind: output, shape index: {}]
  %s5 = sld [smem:[#allocation0]]
  $region26: #{convt_bn_sigmoid.1} parent=0
    _
  %s7 = ssub.s32 1, %s5
  %s8 = scalar_select 0, %s7, %s5
  // Predicated region
  $region2: #{convt_bn_sigmoid.1} parent=0 // pred_check
    _
  $region3: #{convt_bn_sigmoid.1} parent=0 // pred_check_branch
    %10 = sbr.rel (0) target = $region5
  $region4: #{convt_bn_sigmoid.1} parent=0 // pred_region
    _
  $region5: #{convt_bn_sigmoid.1} parent=0 // pred_fallthru
    _
  // Predicated region
  $region6: #{convt_bn_sigmoid.1} parent=0 // pred_check
    _
  $region7: #{convt_bn_sigmoid.1} parent=0 // pred_check_branch
    %12 = sbr.rel (0) target = $region9
  $region8: #{convt_bn_sigmoid.1} parent=0 // pred_region
    _
  $region9: #{convt_bn_sigmoid.1} parent=0 // pred_fallthru
    _
  // Predicated region
  $region10: #{convt_bn_sigmoid.1} parent=0 // pred_check
    _
  $region11: #{convt_bn_sigmoid.1} parent=0 // pred_check_branch
    %14 = sbr.rel (0) target = $region13
  $region12: #{convt_bn_sigmoid.1} parent=0 // pred_region
    _
  $region13: #{convt_bn_sigmoid.1} parent=0 // pred_fallthru
    _
  // Predicated region
  $region14: #{convt_bn_sigmoid.1} parent=0 // pred_check
    _
  $region15: #{convt_bn_sigmoid.1} parent=0 // pred_check_branch
    %16 = sbr.rel (0) target = $region17
  $region16: #{convt_bn_sigmoid.1} parent=0 // pred_region
    _
  $region17: #{convt_bn_sigmoid.1} parent=0 // pred_fallthru
    _
  %vm17 = vcmask 1041408
  %vm18 = vcmask 1043458
  %vm19 = vmor %vm18, %vm17
  %vm20 = vcmask 570372
  %vm21 = vmor %vm20, %vm19
  %22 = vst.msk [vmem:[#allocation2] sm:$0x3f] %vm21, 0.0
  %v23 = vld [vmem:[%s0] sm:$0x3]
  %25 = vrot.lane.b32.xlu0 %v23, 19
  %v26 = vpop.permute.xlu0 %25
  %vm28 = vcmask 279704
  %29 = vst.msk [vmem:[#allocation2] sm:$0x3] %vm28, %v26
  %v30 = vld [vmem:[%s0] sm:$0x3]
  %32 = vrot.lane.b32.xlu0 %v30, 21
  %v33 = vpop.permute.xlu0 %32
  %vm35 = vcmask 427304
  %36 = vst.msk [vmem:[#allocation2] sm:$0x3] %vm35, %v33
  %v37 = vld [vmem:[%s0] sm:$0x3]
  %39 = vrot.lane.b32.xlu0 %v37, 23
  %v40 = vpop.permute.xlu0 %39
  %vm42 = vcmask 574904
  %43 = vst.msk [vmem:[#allocation2] sm:$0x3] %vm42, %v40
  %v44 = vld [vmem:[%s0] sm:$0x3]
  %46 = vrot.lane.b32.xlu0 %v44, 25
  %v47 = vpop.permute.xlu0 %46
  %vm49 = vcmask 722504
  %50 = vst.msk [vmem:[#allocation2] sm:$0x3] %vm49, %v47
  %v51 = vld [vmem:[%s0] sm:$0x3]
  %53 = vrot.lane.b32.xlu0 %v51, 27
  %v54 = vpop.permute.xlu0 %53
  %vm56 = vcmask 870104
  %57 = vst.msk [vmem:[#allocation2] sm:$0x3] %vm56, %v54
  %v58 = vld [vmem:[%s0] sm:$0x3]
  %60 = vrot.lane.b32.xlu0 %v58, 29
  %v61 = vpop.permute.xlu0 %60
  %vm63 = vcmask 1017704
  %64 = vst.msk [vmem:[#allocation2] sm:$0x3] %vm63, %v61
  %v65 = vld [vmem:[%s0] sm:$0x3]
  %67 = vrot.lane.b32.xlu0 %v65, 31
  %v68 = vpop.permute.xlu0 %67
  %v69 = vrot.slane %v68, 6
  %vm70 = vcmask 252928
  %v71 = vsel %vm70, %v69, %v68
  %vm73 = vcmask 1042424
  %vm74 = vcmask 117762
  %vm75 = vmor %vm74, %vm73
  %76 = vst.msk [vmem:[#allocation2] sm:$0xf] %vm75, %v71
  %v77 = vld [vmem:[%s0] sm:$0x3]
  %79 = vrot.lane.b32.xlu0 %v77, 33
  %v80 = vpop.permute.xlu0 %79
  %vm82 = vcmask 263304
  %83 = vst.msk [vmem:[#allocation2 + $0x2] sm:$0x3] %vm82, %v80
  %v84 = vld [vmem:[%s0 + $0x2] sm:$0x3]
  %86 = vrot.lane.b32.xlu0 %v84, 35
  %v87 = vpop.permute.xlu0 %86
  %vm89 = vcmask 410904
  %90 = vst.msk [vmem:[#allocation2 + $0x2] sm:$0x3] %vm89, %v87
  %v91 = vld [vmem:[%s0 + $0x2] sm:$0x3]
  %93 = vrot.lane.b32.xlu0 %v91, 37
  %v94 = vpop.permute.xlu0 %93
  %vm96 = vcmask 558504
  %97 = vst.msk [vmem:[#allocation2 + $0x2] sm:$0x3] %vm96, %v94
  %v98 = vld [vmem:[%s0 + $0x2] sm:$0x3]
  %100 = vrot.lane.b32.xlu0 %v98, 39
  %v101 = vpop.permute.xlu0 %100
  %vm103 = vcmask 706104
  %104 = vst.msk [vmem:[#allocation2 + $0x2] sm:$0x3] %vm103, %v101
  %v105 = vld [vmem:[%s0 + $0x2] sm:$0x3]
  %107 = vrot.lane.b32.xlu0 %v105, 41
  %v108 = vpop.permute.xlu0 %107
  %vm110 = vcmask 853704
  %111 = vst.msk [vmem:[#allocation2 + $0x2] sm:$0x3] %vm110, %v108
  %v112 = vld [vmem:[%s0 + $0x2] sm:$0x3]
  %114 = vrot.lane.b32.xlu0 %v112, 43
  %v115 = vpop.permute.xlu0 %114
  %vm117 = vcmask 1001304
  %118 = vst.msk [vmem:[#allocation2 + $0x2] sm:$0x3] %vm117, %v115
  %v119 = vld [vmem:[%s0 + $0x2] sm:$0x3]
  %121 = vrot.lane.b32.xlu0 %v119, 45
  %v122 = vpop.permute.xlu0 %121
  %v123 = vrot.slane %v122, 6
  %vm124 = vcmask 367616
  %v125 = vsel %vm124, %v123, %v122
  %vm127 = vcmask 1042408
  %vm128 = vcmask 101378
  %vm129 = vmor %vm128, %vm127
  %130 = vst.msk [vmem:[#allocation2 + $0x2] sm:$0xf] %vm129, %v125
  %v131 = vld [vmem:[%s0 + $0x2] sm:$0x3]
  %133 = vrot.lane.b32.xlu0 %v131, 47
  %v134 = vpop.permute.xlu0 %133
  %vm136 = vcmask 246904
  %137 = vst.msk [vmem:[#allocation2 + $0x4] sm:$0x3] %vm136, %v134
  %v138 = vld [vmem:[%s0 + $0x2] sm:$0x3]
  %140 = vrot.lane.b32.xlu0 %v138, 49
  %v141 = vpop.permute.xlu0 %140
  %vm143 = vcmask 394504
  %144 = vst.msk [vmem:[#allocation2 + $0x4] sm:$0x3] %vm143, %v141
  %v145 = vld [vmem:[#allocation2] sm:$0x3f]
  %147 = vst [vmem:[#allocation1] ss:$4 sm:$0xff] %v145
  %v148 = vld.sshfl [vmem:[#allocation1] sm:$0xff pattern:$0x73625140]
  %v149 = vld.sshfl [vmem:[#allocation1 + $0x8] sm:$0xff pattern:$0x73625140]
  %v150 = vld.sshfl [vmem:[#allocation1 + $0x10] sm:$0xff pattern:$0x73625140]
  %154 = vst [vmem:[#allocation3] sm:$0x3] %v148
  %155 = vst [vmem:[#allocation3 + $0x8] sm:$0x3] %v149
  %vm156 = vcmask 254976
  %157 = vst.msk [vmem:[#allocation3 + $0x10] sm:$0x3] %vm156, %v150
  %v158 = vld [vmem:[#allocation2] sm:$0x3f]
  %s160 = scalar_lea.vmem [#allocation1], 1
  %161 = vst [vmem:[%s160] ss:$4 sm:$0xff] %v158
  %v162 = vld.sshfl [vmem:[#allocation1] sm:$0xff pattern:$0x73625140]
  %v163 = vld.sshfl [vmem:[#allocation1 + $0x8] sm:$0xff pattern:$0x73625140]
  %v164 = vld.sshfl [vmem:[#allocation1 + $0x10] sm:$0xff pattern:$0x73625140]
  %165 = vrot.lane.b32.xlu0 %v162, 127
  %v166 = vpop.permute.xlu0 %165
  %167 = vrot.lane.b32.xlu0 %v163, 127
  %v168 = vpop.permute.xlu0 %167
  %169 = vrot.lane.b32.xlu0 %v164, 127
  %v170 = vpop.permute.xlu0 %169
  %vm171 = vcmask 1039360
  %v172 = vsel %vm171, %v166, %v168
  %v173 = vsel %vm171, %v168, %v170
  %177 = vst [vmem:[#allocation3] sm:$0xc] %v172
  %178 = vst [vmem:[#allocation3 + $0x8] sm:$0xc] %v173
  %vm179 = vcmask 257026
  %180 = vst.msk [vmem:[#allocation3 + $0x10] sm:$0xc] %vm179, %v170
  %v181 = vld [vmem:[#allocation2] sm:$0x3f]
  %s183 = scalar_lea.vmem [#allocation1], 2
  %184 = vst [vmem:[%s183] ss:$4 sm:$0xff] %v181
  %v185 = vld.sshfl [vmem:[#allocation1] sm:$0xff pattern:$0x73625140]
  %v186 = vld.sshfl [vmem:[#allocation1 + $0x8] sm:$0xff pattern:$0x73625140]
  %v187 = vld.sshfl [vmem:[#allocation1 + $0x10] sm:$0xff pattern:$0x73625140]
  %188 = vrot.lane.b32.xlu0 %v185, 126
  %v189 = vpop.permute.xlu0 %188
  %190 = vrot.lane.b32.xlu0 %v186, 126
  %v191 = vpop.permute.xlu0 %190
  %192 = vrot.lane.b32.xlu0 %v187, 126
  %v193 = vpop.permute.xlu0 %192
  %vm194 = vcmask 1031168
  %v195 = vsel %vm194, %v189, %v191
  %v196 = vsel %vm194, %v191, %v193
  %200 = vst [vmem:[#allocation3] sm:$0x30] %v195
  %201 = vst [vmem:[#allocation3 + $0x8] sm:$0x30] %v196
  %vm202 = vcmask 259076
  %203 = vst.msk [vmem:[#allocation3 + $0x10] sm:$0x30] %vm202, %v193
  %v204 = vld [vmem:[#allocation2] sm:$0x3f]
  %s206 = scalar_lea.vmem [#allocation1], 3
  %207 = vst [vmem:[%s206] ss:$4 sm:$0xff] %v204
  %v208 = vld.sshfl [vmem:[#allocation1] sm:$0xff pattern:$0x73625140]
  %v209 = vld.sshfl [vmem:[#allocation1 + $0x8] sm:$0xff pattern:$0x73625140]
  %v210 = vld.sshfl [vmem:[#allocation1 + $0x10] sm:$0xff pattern:$0x73625140]
  %211 = vrot.lane.b32.xlu0 %v208, 110
  %v212 = vpop.permute.xlu0 %211
  %213 = vrot.lane.b32.xlu0 %v209, 110
  %v214 = vpop.permute.xlu0 %213
  %215 = vrot.lane.b32.xlu0 %v210, 110
  %v216 = vpop.permute.xlu0 %215
  %vm217 = vcmask 900096
  %v218 = vsel %vm217, %v212, %v214
  %v219 = vsel %vm217, %v214, %v216
  %223 = vst [vmem:[#allocation3] sm:$0xc0] %v218
  %224 = vst [vmem:[#allocation3 + $0x8] sm:$0xc0] %v219
  %vm225 = vcmask 261126
  %226 = vst.msk [vmem:[#allocation3 + $0x10] sm:$0xc0] %vm225, %v216
  %v227 = vld [vmem:[#allocation2] sm:$0x3f]
  %229 = vst [vmem:[#allocation1] ss:$4 sm:$0xff] %v227
  %v230 = vld.sshfl [vmem:[#allocation1] sm:$0xff pattern:$0x73625140]
  %v231 = vld.sshfl [vmem:[#allocation1 + $0x8] sm:$0xff pattern:$0x73625140]
  %v232 = vld.sshfl [vmem:[#allocation1 + $0x10] sm:$0xff pattern:$0x73625140]
  %233 = vrot.lane.b32.xlu0 %v230, 109
  %v234 = vpop.permute.xlu0 %233
  %235 = vrot.lane.b32.xlu0 %v231, 109
  %v236 = vpop.permute.xlu0 %235
  %237 = vrot.lane.b32.xlu0 %v232, 109
  %v238 = vpop.permute.xlu0 %237
  %vm239 = vcmask 891904
  %v240 = vsel %vm239, %v234, %v236
  %v241 = vsel %vm239, %v236, %v238
  %245 = vst [vmem:[#allocation3 + $0x18] sm:$0x3] %v240
  %246 = vst [vmem:[#allocation3 + $0x20] sm:$0x3] %v241
  %247 = vst.msk [vmem:[#allocation3 + $0x28] sm:$0x3] %vm156, %v238
  %v248 = vld [vmem:[#allocation2] sm:$0x3f]
  %s250 = scalar_lea.vmem [#allocation1], 1
  %251 = vst [vmem:[%s250] ss:$4 sm:$0xff] %v248
  %v252 = vld.sshfl [vmem:[#allocation1] sm:$0xff pattern:$0x73625140]
  %v253 = vld.sshfl [vmem:[#allocation1 + $0x8] sm:$0xff pattern:$0x73625140]
  %v254 = vld.sshfl [vmem:[#allocation1 + $0x10] sm:$0xff pattern:$0x73625140]
  %255 = vrot.lane.b32.xlu0 %v252, 108
  %v256 = vpop.permute.xlu0 %255
  %257 = vrot.lane.b32.xlu0 %v253, 108
  %v258 = vpop.permute.xlu0 %257
  %259 = vrot.lane.b32.xlu0 %v254, 108
  %v260 = vpop.permute.xlu0 %259
  %vm261 = vcmask 883712
  %v262 = vsel %vm261, %v256, %v258
  %v263 = vsel %vm261, %v258, %v260
  %267 = vst [vmem:[#allocation3 + $0x18] sm:$0xc] %v262
  %268 = vst [vmem:[#allocation3 + $0x20] sm:$0xc] %v263
  %269 = vst.msk [vmem:[#allocation3 + $0x28] sm:$0xc] %vm179, %v260
  %v270 = vld [vmem:[#allocation2] sm:$0x3f]
  %s272 = scalar_lea.vmem [#allocation1], 2
  %273 = vst [vmem:[%s272] ss:$4 sm:$0xff] %v270
  %v274 = vld.sshfl [vmem:[#allocation1] sm:$0xff pattern:$0x73625140]
  %v275 = vld.sshfl [vmem:[#allocation1 + $0x8] sm:$0xff pattern:$0x73625140]
  %v276 = vld.sshfl [vmem:[#allocation1 + $0x10] sm:$0xff pattern:$0x73625140]
  %277 = vrot.lane.b32.xlu0 %v274, 92
  %v278 = vpop.permute.xlu0 %277
  %279 = vrot.lane.b32.xlu0 %v275, 92
  %v280 = vpop.permute.xlu0 %279
  %281 = vrot.lane.b32.xlu0 %v276, 92
  %v282 = vpop.permute.xlu0 %281
  %vm283 = vcmask 752640
  %v284 = vsel %vm283, %v278, %v280
  %v285 = vsel %vm283, %v280, %v282
  %289 = vst [vmem:[#allocation3 + $0x18] sm:$0x30] %v284
  %290 = vst [vmem:[#allocation3 + $0x20] sm:$0x30] %v285
  %291 = vst.msk [vmem:[#allocation3 + $0x28] sm:$0x30] %vm202, %v282
  %v292 = vld [vmem:[#allocation2] sm:$0x3f]
  %s294 = scalar_lea.vmem [#allocation1], 3
  %295 = vst [vmem:[%s294] ss:$4 sm:$0xff] %v292
  %v296 = vld.sshfl [vmem:[#allocation1] sm:$0xff pattern:$0x73625140]
  %v297 = vld.sshfl [vmem:[#allocation1 + $0x8] sm:$0xff pattern:$0x73625140]
  %v298 = vld.sshfl [vmem:[#allocation1 + $0x10] sm:$0xff pattern:$0x73625140]
  %299 = vrot.lane.b32.xlu0 %v296, 91
  %v300 = vpop.permute.xlu0 %299
  %301 = vrot.lane.b32.xlu0 %v297, 91
  %v302 = vpop.permute.xlu0 %301
  %303 = vrot.lane.b32.xlu0 %v298, 91
  %v304 = vpop.permute.xlu0 %303
  %vm305 = vcmask 744448
  %v306 = vsel %vm305, %v300, %v302
  %v307 = vsel %vm305, %v302, %v304
  %311 = vst [vmem:[#allocation3 + $0x18] sm:$0xc0] %v306
  %312 = vst [vmem:[#allocation3 + $0x20] sm:$0xc0] %v307
  %313 = vst.msk [vmem:[#allocation3 + $0x28] sm:$0xc0] %vm225, %v304
  %v314 = vld [vmem:[#allocation2] sm:$0x3f]
  %316 = vst [vmem:[#allocation1] ss:$4 sm:$0xff] %v314
  %v317 = vld.sshfl [vmem:[#allocation1] sm:$0xff pattern:$0x73625140]
  %v318 = vld.sshfl [vmem:[#allocation1 + $0x8] sm:$0xff pattern:$0x73625140]
  %v319 = vld.sshfl [vmem:[#allocation1 + $0x10] sm:$0xff pattern:$0x73625140]
  %320 = vrot.lane.b32.xlu0 %v317, 90
  %v321 = vpop.permute.xlu0 %320
  %322 = vrot.lane.b32.xlu0 %v318, 90
  %v323 = vpop.permute.xlu0 %322
  %324 = vrot.lane.b32.xlu0 %v319, 90
  %v325 = vpop.permute.xlu0 %324
  %vm326 = vcmask 736256
  %v327 = vsel %vm326, %v321, %v323
  %v328 = vsel %vm326, %v323, %v325
  %332 = vst [vmem:[#allocation3 + $0x30] sm:$0x3] %v327
  %333 = vst [vmem:[#allocation3 + $0x38] sm:$0x3] %v328
  %334 = vst.msk [vmem:[#allocation3 + $0x40] sm:$0x3] %vm156, %v325
  %v335 = vld [vmem:[%s1] sm:$0xff]
  %v336 = vld [vmem:[%s1 + $0x8] sm:$0xff]
  %v337 = vld [vmem:[#allocation3] sm:$0xff]
  %v338 = vld [vmem:[#allocation3 + $0x8] sm:$0xff]
  %v339 = vld [vmem:[#allocation3 + $0x10] sm:$0xff]
  %v340 = vld [vmem:[#allocation3 + $0x18] sm:$0xff]
  %v341 = vld [vmem:[#allocation3 + $0x20] sm:$0xff]
  %v342 = vld [vmem:[#allocation3 + $0x28] sm:$0xff]
  %v343 = vld [vmem:[#allocation3 + $0x30] sm:$0x3]
  %v344 = vld [vmem:[#allocation3 + $0x38] sm:$0x3]
  %v345 = vld [vmem:[#allocation3 + $0x40] sm:$0x3]
  %vm346 = vcmask 146432
  %v348 = vsel %vm346, %v335, 0
  %v351 = vsel %vm346, %v336, 0
  %v354 = vsel %vm17, %v343, 0
  %v357 = vsel %vm17, %v344, 0
  %v360 = vsel %vm17, %v345, 0
  %362 = vmatpush.msra.mxu0 0.0
  %363 = vmatpush.msra.mxu0 0.0
  %364 = vmatpush.msra.mxu0 0.0
  %365 = vmatpush.msra.mxu0 0.0
  %366 = vmatpush.msra.mxu0 0.0
  %367 = vmatpush.msra.mxu0 0.0
  %368 = vmatpush.msra.mxu0 0.0
  %369 = vmatpush.msra.mxu0 0.0
  %370 = vmatpush.msra.mxu0 0.0
  %371 = vmatpush.msra.mxu0 0.0
  %372 = vmatpush.msra.mxu0 0.0
  %373 = vmatpush.msra.mxu0 0.0
  %374 = vmatpush.msra.mxu0 0.0
  %375 = vmatpush.msra.mxu0 %v354
  %376 = vmatpush.msra.mxu0 %v340
  %377 = vmatpush.msra.mxu0 %v337
  %378 = vmatmul.f32.gmra.mxu0 %v348
  %v379 = vpop.f32.mrf.mxu0
  %v380 = vadd.f32 0.0, %v379
  %381 = vmatmul.f32.gmra.mxu0 %v351
  %v382 = vpop.f32.mrf.mxu0
  %v383 = vadd.f32 0.0, %v382
  %384 = vdwg.mxu0
  %385 = vmatpush.msra.mxu0 0.0
  %386 = vmatpush.msra.mxu0 0.0
  %387 = vmatpush.msra.mxu0 0.0
  %388 = vmatpush.msra.mxu0 0.0
  %389 = vmatpush.msra.mxu0 0.0
  %390 = vmatpush.msra.mxu0 0.0
  %391 = vmatpush.msra.mxu0 0.0
  %392 = vmatpush.msra.mxu0 0.0
  %393 = vmatpush.msra.mxu0 0.0
  %394 = vmatpush.msra.mxu0 0.0
  %395 = vmatpush.msra.mxu0 0.0
  %396 = vmatpush.msra.mxu0 0.0
  %397 = vmatpush.msra.mxu0 0.0
  %398 = vmatpush.msra.mxu0 %v357
  %399 = vmatpush.msra.mxu0 %v341
  %400 = vmatpush.msra.mxu0 %v338
  %401 = vmatmul.f32.gmra.mxu0 %v348
  %v402 = vpop.f32.mrf.mxu0
  %v403 = vadd.f32 0.0, %v402
  %404 = vmatmul.f32.gmra.mxu0 %v351
  %v405 = vpop.f32.mrf.mxu0
  %v406 = vadd.f32 0.0, %v405
  %407 = vdwg.mxu0
  %408 = vmatpush.msra.mxu0 0.0
  %409 = vmatpush.msra.mxu0 0.0
  %410 = vmatpush.msra.mxu0 0.0
  %411 = vmatpush.msra.mxu0 0.0
  %412 = vmatpush.msra.mxu0 0.0
  %413 = vmatpush.msra.mxu0 0.0
  %414 = vmatpush.msra.mxu0 0.0
  %415 = vmatpush.msra.mxu0 0.0
  %416 = vmatpush.msra.mxu0 0.0
  %417 = vmatpush.msra.mxu0 0.0
  %418 = vmatpush.msra.mxu0 0.0
  %419 = vmatpush.msra.mxu0 0.0
  %420 = vmatpush.msra.mxu0 0.0
  %421 = vmatpush.msra.mxu0 %v360
  %422 = vmatpush.msra.mxu0 %v342
  %423 = vmatpush.msra.mxu0 %v339
  %424 = vmatmul.f32.gmra.mxu0 %v348
  %v425 = vpop.f32.mrf.mxu0
  %v426 = vadd.f32 0.0, %v425
  %427 = vmatmul.f32.gmra.mxu0 %v351
  %v428 = vpop.f32.mrf.mxu0
  %v429 = vadd.f32 0.0, %v428
  %430 = vdwg.mxu0
  %v431 = vld [vmem:[%s3] sm:$0x7]
  %v433 = vperm.slane %v431, 0
  %v434 = vperm.slane %v431, 1
  %v435 = vperm.slane %v431, 2
  %v439 = vmul.f32 %v380, %v433
  %v440 = vmul.f32 %v403, %v434
  %v441 = vmul.f32 %v426, %v435
  %v442 = vmul.f32 %v383, %v433
  %v443 = vmul.f32 %v406, %v434
  %v444 = vmul.f32 %v429, %v435
  %v445 = vadd.f32 %v439, %v440
  %vm446 = vcmask 261120
  %v447 = vsel %vm446, %v441, 0.0
  %v448 = vadd.f32 %v445, %v447
  %449 = vadd.xlane.f32.xlu0 %v448
  %v450 = vpop.xlane.xlu0 %449
  %v451 = vadd.f32 %v442, %v443
  %v452 = vsel %vm446, %v444, 0.0
  %v453 = vadd.f32 %v451, %v452
  %454 = vadd.xlane.f32.xlu0 %v453
  %v455 = vpop.xlane.xlu0 %454
  %v456 = vadd.f32 %v450, 0.0
  %v457 = vadd.f32 %v455, 0.0
  %v458 = vmul.f32 %v380, %v439
  %v459 = vmul.f32 %v403, %v440
  %v460 = vmul.f32 %v426, %v441
  %v461 = vmul.f32 %v383, %v442
  %v462 = vmul.f32 %v406, %v443
  %v463 = vmul.f32 %v429, %v444
  %v464 = vadd.f32 %v458, %v459
  %v465 = vsel %vm446, %v460, 0.0
  %v466 = vadd.f32 %v464, %v465
  %467 = vadd.xlane.f32.xlu0 %v466
  %v468 = vpop.xlane.xlu0 %467
  %v469 = vadd.f32 %v461, %v462
  %v470 = vsel %vm446, %v463, 0.0
  %v471 = vadd.f32 %v469, %v470
  %472 = vadd.xlane.f32.xlu0 %v471
  %v473 = vpop.xlane.xlu0 %472
  %v474 = vadd.f32 %v468, 0.0
  %v475 = vadd.f32 %v473, 0.0
  %v476 = vmul.f32 %v456, 0.00390625
  %v477 = vmul.f32 %v457, 0.00390625
  %v478 = vmul.f32 %v474, 0.00390625
  %v479 = vmul.f32 %v475, 0.00390625
  %v480 = vmul.f32 %v476, %v476
  %v481 = vmul.f32 %v477, %v477
  %v482 = vsub.f32 %v478, %v480
  %v483 = vsub.f32 %v479, %v481
  %v484 = vld [vmem:[%s2] sm:$0xff]
  %v485 = vld [vmem:[%s2 + $0x8] sm:$0xff]
  %v486 = vadd.f32 %v482, 1e-05
  %v487 = vadd.f32 %v483, 1e-05
  %v488 = vrsqrt.pop %v486
  %v489 = vmul.f32 %v488, %v486
  %v490 = vmul.f32 %v489, %v488
  %v491 = vmul.f32 0.5, %v490
  %v492 = vsub.f32 1.5, %v491
  %v493 = vmul.f32 %v488, %v492
  %vm494 = vweird.f32 %v486
  %vm495 = vweird.f32 %v488
  %vm496 = vmor %vm494, %vm495
  %v497 = vsel %vm496, %v488, %v493
  %v498 = vrsqrt.pop %v487
  %v499 = vmul.f32 %v498, %v487
  %v500 = vmul.f32 %v499, %v498
  %v501 = vmul.f32 0.5, %v500
  %v502 = vsub.f32 1.5, %v501
  %v503 = vmul.f32 %v498, %v502
  %vm504 = vweird.f32 %v487
  %vm505 = vweird.f32 %v498
  %vm506 = vmor %vm504, %vm505
  %v507 = vsel %vm506, %v498, %v503
  %v508 = vmul.f32 %v484, %v497
  %v509 = vmul.f32 %v485, %v507
  %v510 = vmul.f32 %v476, %v508
  %v511 = vmul.f32 %v477, %v509
  %514 = vrot.lane.b32.xlu0 %v510, 1
  %v515 = vpop.permute.xlu0 %514
  %516 = vrot.lane.b32.xlu0 %v511, 1
  %v517 = vpop.permute.xlu0 %516
  %v520 = vsub.f32 %v484, %v515
  %v521 = vsub.f32 %v485, %v517
  %523 = vset.pattern.permute.xlu0 0
  %524 = vperm.xlu0 %523, %v508
  %v525 = vpop.permute.xlu0 %524
  %528 = vset.pattern.permute.xlu0 0
  %529 = vperm.xlu0 %528, %v509
  %v530 = vpop.permute.xlu0 %529
  %v532 = vmul.f32 %v380, %v525
  %v533 = vmul.f32 %v403, %v525
  %v534 = vmul.f32 %v426, %v525
  %v535 = vmul.f32 %v383, %v530
  %v536 = vmul.f32 %v406, %v530
  %v537 = vmul.f32 %v429, %v530
  %539 = vset.pattern.permute.xlu0 1
  %540 = vperm.xlu0 %539, %v520
  %v541 = vpop.permute.xlu0 %540
  %544 = vset.pattern.permute.xlu0 1
  %545 = vperm.xlu0 %544, %v521
  %v546 = vpop.permute.xlu0 %545
  %v548 = vadd.f32 %v532, %v541
  %v549 = vadd.f32 %v533, %v541
  %v550 = vadd.f32 %v534, %v541
  %v551 = vadd.f32 %v535, %v546
  %v552 = vadd.f32 %v536, %v546
  %v553 = vadd.f32 %v537, %v546
  %v554 = vmul.f32 %v548, 0.5
  %v555 = vmul.f32 %v549, 0.5
  %v556 = vmul.f32 %v550, 0.5
  %v557 = vmul.f32 %v551, 0.5
  %v558 = vmul.f32 %v552, 0.5
  %v559 = vmul.f32 %v553, 0.5
  %v560 = vtanh.pop %v554
  %v561 = vtanh.pop %v555
  %v562 = vtanh.pop %v556
  %v563 = vtanh.pop %v557
  %v564 = vtanh.pop %v558
  %v565 = vtanh.pop %v559
  %v566 = vmul.f32 %v560, 0.5
  %v567 = vmul.f32 %v561, 0.5
  %v568 = vmul.f32 %v562, 0.5
  %v569 = vmul.f32 %v563, 0.5
  %v570 = vmul.f32 %v564, 0.5
  %v571 = vmul.f32 %v565, 0.5
  %v572 = vadd.f32 %v566, 0.5
  %v573 = vadd.f32 %v567, 0.5
  %v574 = vadd.f32 %v568, 0.5
  %v575 = vadd.f32 %v569, 0.5
  %v576 = vadd.f32 %v570, 0.5
  %v577 = vadd.f32 %v571, 0.5
  %vm578 = vcmask 130048
  %579 = vst.msk [vmem:[%s4] sm:$0xff] %vm578, %v572
  %580 = vst.msk [vmem:[%s4 + $0x10] sm:$0xff] %vm578, %v575
  %583 = vrot.lane.b32.xlu0 %v572, 126
  %v584 = vpop.permute.xlu0 %583
  %585 = vrot.lane.b32.xlu0 %v575, 126
  %v586 = vpop.permute.xlu0 %585
  %vm589 = vcmask 261248
  %590 = vst.msk [vmem:[%s4] sm:$0xff] %vm589, %v584
  %591 = vst.msk [vmem:[%s4 + $0x10] sm:$0xff] %vm589, %v586
  %592 = vrot.lane.b32.xlu0 %v572, 124
  %v593 = vpop.permute.xlu0 %592
  %594 = vrot.lane.b32.xlu0 %v575, 124
  %v595 = vpop.permute.xlu0 %594
  %vm598 = vcmask 392448
  %599 = vst.msk [vmem:[%s4] sm:$0xff] %vm598, %v593
  %600 = vst.msk [vmem:[%s4 + $0x10] sm:$0xff] %vm598, %v595
  %601 = vrot.lane.b32.xlu0 %v572, 122
  %v602 = vpop.permute.xlu0 %601
  %603 = vrot.lane.b32.xlu0 %v575, 122
  %v604 = vpop.permute.xlu0 %603
  %vm607 = vcmask 523648
  %608 = vst.msk [vmem:[%s4] sm:$0xff] %vm607, %v602
  %609 = vst.msk [vmem:[%s4 + $0x10] sm:$0xff] %vm607, %v604
  %610 = vrot.lane.b32.xlu0 %v572, 120
  %v611 = vpop.permute.xlu0 %610
  %612 = vrot.lane.b32.xlu0 %v575, 120
  %v613 = vpop.permute.xlu0 %612
  %vm616 = vcmask 654848
  %617 = vst.msk [vmem:[%s4] sm:$0xff] %vm616, %v611
  %618 = vst.msk [vmem:[%s4 + $0x10] sm:$0xff] %vm616, %v613
  %619 = vrot.lane.b32.xlu0 %v572, 118
  %v620 = vpop.permute.xlu0 %619
  %621 = vrot.lane.b32.xlu0 %v575, 118
  %v622 = vpop.permute.xlu0 %621
  %vm625 = vcmask 786048
  %626 = vst.msk [vmem:[%s4] sm:$0xff] %vm625, %v620
  %627 = vst.msk [vmem:[%s4 + $0x10] sm:$0xff] %vm625, %v622
  %628 = vrot.lane.b32.xlu0 %v572, 116
  %v629 = vpop.permute.xlu0 %628
  %630 = vrot.lane.b32.xlu0 %v575, 116
  %v631 = vpop.permute.xlu0 %630
  %vm634 = vcmask 917248
  %635 = vst.msk [vmem:[%s4] sm:$0xff] %vm634, %v629
  %636 = vst.msk [vmem:[%s4 + $0x10] sm:$0xff] %vm634, %v631
  %639 = vrot.lane.b32.xlu0 %v572, 114
  %v640 = vpop.permute.xlu0 %639
  %641 = vrot.lane.b32.xlu0 %v573, 114
  %v642 = vpop.permute.xlu0 %641
  %643 = vrot.lane.b32.xlu0 %v575, 114
  %v644 = vpop.permute.xlu0 %643
  %645 = vrot.lane.b32.xlu0 %v576, 114
  %v646 = vpop.permute.xlu0 %645
  %vm647 = vcmask 932864
  %v648 = vsel %vm647, %v640, %v642
  %v649 = vsel %vm647, %v644, %v646
  %vm652 = vcmask 1048448
  %653 = vst.msk [vmem:[%s4] sm:$0xff] %vm652, %v648
  %654 = vst.msk [vmem:[%s4 + $0x10] sm:$0xff] %vm652, %v649
  %655 = vrot.lane.b32.xlu0 %v573, 112
  %v656 = vpop.permute.xlu0 %655
  %657 = vrot.lane.b32.xlu0 %v576, 112
  %v658 = vpop.permute.xlu0 %657
  %661 = vst.msk [vmem:[%s4 + $0x8] sm:$0xff] %vm578, %v656
  %662 = vst.msk [vmem:[%s4 + $0x18] sm:$0xff] %vm578, %v658
  %663 = vrot.lane.b32.xlu0 %v573, 110
  %v664 = vpop.permute.xlu0 %663
  %665 = vrot.lane.b32.xlu0 %v576, 110
  %v666 = vpop.permute.xlu0 %665
  %669 = vst.msk [vmem:[%s4 + $0x8] sm:$0xff] %vm589, %v664
  %670 = vst.msk [vmem:[%s4 + $0x18] sm:$0xff] %vm589, %v666
  %671 = vrot.lane.b32.xlu0 %v573, 108
  %v672 = vpop.permute.xlu0 %671
  %673 = vrot.lane.b32.xlu0 %v576, 108
  %v674 = vpop.permute.xlu0 %673
  %677 = vst.msk [vmem:[%s4 + $0x8] sm:$0xff] %vm598, %v672
  %678 = vst.msk [vmem:[%s4 + $0x18] sm:$0xff] %vm598, %v674
  %679 = vrot.lane.b32.xlu0 %v573, 106
  %v680 = vpop.permute.xlu0 %679
  %681 = vrot.lane.b32.xlu0 %v576, 106
  %v682 = vpop.permute.xlu0 %681
  %685 = vst.msk [vmem:[%s4 + $0x8] sm:$0xff] %vm607, %v680
  %686 = vst.msk [vmem:[%s4 + $0x18] sm:$0xff] %vm607, %v682
  %687 = vrot.lane.b32.xlu0 %v573, 104
  %v688 = vpop.permute.xlu0 %687
  %689 = vrot.lane.b32.xlu0 %v576, 104
  %v690 = vpop.permute.xlu0 %689
  %693 = vst.msk [vmem:[%s4 + $0x8] sm:$0xff] %vm616, %v688
  %694 = vst.msk [vmem:[%s4 + $0x18] sm:$0xff] %vm616, %v690
  %695 = vrot.lane.b32.xlu0 %v573, 102
  %v696 = vpop.permute.xlu0 %695
  %697 = vrot.lane.b32.xlu0 %v576, 102
  %v698 = vpop.permute.xlu0 %697
  %701 = vst.msk [vmem:[%s4 + $0x8] sm:$0xff] %vm625, %v696
  %702 = vst.msk [vmem:[%s4 + $0x18] sm:$0xff] %vm625, %v698
  %705 = vrot.lane.b32.xlu0 %v573, 100
  %v706 = vpop.permute.xlu0 %705
  %707 = vrot.lane.b32.xlu0 %v574, 100
  %v708 = vpop.permute.xlu0 %707
  %709 = vrot.lane.b32.xlu0 %v576, 100
  %v710 = vpop.permute.xlu0 %709
  %711 = vrot.lane.b32.xlu0 %v577, 100
  %v712 = vpop.permute.xlu0 %711
  %vm713 = vcmask 818176
  %v714 = vsel %vm713, %v706, %v708
  %v715 = vsel %vm713, %v710, %v712
  %718 = vst.msk [vmem:[%s4 + $0x8] sm:$0xff] %vm634, %v714
  %719 = vst.msk [vmem:[%s4 + $0x18] sm:$0xff] %vm634, %v715
  %720 = vrot.lane.b32.xlu0 %v574, 98
  %v721 = vpop.permute.xlu0 %720
  %722 = vrot.lane.b32.xlu0 %v577, 98
  %v723 = vpop.permute.xlu0 %722
  %726 = vst.msk [vmem:[%s4 + $0x8] sm:$0xff] %vm652, %v721
  %727 = vst.msk [vmem:[%s4 + $0x18] sm:$0xff] %vm652, %v723
  // Predicated region
  $region18: #{convt_bn_sigmoid.1} parent=0 // pred_check
    _
  $region19: #{convt_bn_sigmoid.1} parent=0 // pred_check_branch
    %729 = sbr.rel (0) target = $region21
  $region20: #{convt_bn_sigmoid.1} parent=0 // pred_region
    _
  $region21: #{convt_bn_sigmoid.1} parent=0 // pred_fallthru
    _
  // Predicated region
  $region22: #{convt_bn_sigmoid.1} parent=0 // pred_check
    _
  $region23: #{convt_bn_sigmoid.1} parent=0 // pred_check_branch
    %731 = sbr.rel (0) target = $region25
  $region24: #{convt_bn_sigmoid.1} parent=0 // pred_region
    _
  $region25: #{convt_bn_sigmoid.1} parent=0 // pred_fallthru
    _

</llo_original>
